<compile_context>
chip_gen: v5e
topology: v5e:2x2
jax: 0.10.0
libtpu: 0.0.40
codegen_flags: <defaults>
</compile_context>

<pallas_src>
import jax
import jax.numpy as jnp
import numpy as np
from jax import lax
from jax.experimental import pallas as pl
from jax.experimental.pallas import tpu as pltpu

_HIGHEST = lax.Precision.HIGHEST


def _gat_kernel(h_ref, f1_ref, f2_ref, adj_ref, bias_ref, out_ref):
    # h:    (Np, Fp)  f32 or bf16 (precomputed x @ W, lane-padded)
    # f1:   (tq, 1)   f32  = (x W) a1 for this query-row tile
    # f2:   (1, Np)   f32  = ((x W) a2)^T
    # adj:  (tq, Np)  int8 {0, 1}
    # bias: (1, Fp)   f32
    # out:  (tq, Fp)  f32
    #
    # e[i, j] = LeakyReLU_{slope=-0.2}( h_i . a1 + h_j . a2 )   (rank-1
    # decomposition of the reference's N*N*2F concat).
    e = f1_ref[...] + f2_ref[...]                            # (tq, Np) f32
    e = jnp.where(e > 0, e, -0.2 * e)                        # nn.LeakyReLU(negative_slope=-0.2)

    # adjacency mask + numerically-stable softmax over the key axis
    logits = jnp.where(adj_ref[...] != 0, e, jnp.float32(-9.0e15))
    m = jnp.max(logits, axis=-1, keepdims=True)
    p = jnp.exp(logits - m)
    att = p / jnp.sum(p, axis=-1, keepdims=True)             # exact divide (torch parity)

    # TODO(synk): F.dropout(attention, p, training=self.training) — eval-mode
    # forward, so dropout is a no-op here.

    h_prime = jnp.dot(att.astype(h_ref.dtype), h_ref[...],
                      preferred_element_type=jnp.float32) + bias_ref[...]
    # ELU(alpha=1); clamp the exp argument so the discarded branch can't overflow.
    neg = jnp.exp(jnp.minimum(h_prime, 0.0)) - 1.0
    out_ref[...] = jnp.where(h_prime > 0.0, h_prime, neg).astype(out_ref.dtype)


def _round_up(v, m):
    return (v + m - 1) // m * m


def _vmem_limit_bytes():
    # v5e/v6e: 128 MiB VMEM / TensorCore, v7x: 64 MiB.  Never ask for more
    # than ~3/4 of physical capacity (leave compiler-internal headroom).
    try:
        cap = pltpu.get_tpu_info().vmem_capacity_bytes
        return min(64 * 1024 * 1024, cap * 3 // 4)
    except Exception:
        return 48 * 1024 * 1024


def gat_layer(x, adj, W, a, bias, *, tq=128, compute_dtype=jnp.float32):
    """GraphAttentionLayer forward.

    x: (B, N, Fin) f32, adj: (B, N, N) (only adj > 0 is used),
    W: (Fin, Fout), a: (2*Fout, 1), bias: (1, Fout).  Returns (B, N, Fout) f32.

    compute_dtype controls the dtype of the dominant att @ h MXU pass:
    float32 for exact parity with the torch module, bfloat16 for 2-4x MXU
    throughput on v6e/v7x (f32 accumulation, ~1e-3 absolute error).
    """
    B, N, Fin = x.shape
    Fout = W.shape[1]
    f32 = jnp.float32

    Fp = _round_up(Fout, 128)                              # lane-dense feature axis
    # Row tile and key axis are both multiples of 128: full vregs on the whole
    # elementwise softmax path, unmasked int8 adj tiles, unragged MXU dims.
    tq_eff = min(_round_up(tq, 128), _round_up(N, 128))
    Np = _round_up(N, tq_eff)
    n_q = Np // tq_eff

    x = x.astype(f32)
    W = W.astype(f32)
    a = a.astype(f32)

    # Hoisted precompute (plain XLA, done once — not per row tile):
    h = jnp.matmul(x, W, precision=_HIGHEST)                                # (B, N, Fout)
    f1 = jnp.matmul(h, a[:Fout, :], precision=_HIGHEST)                     # (B, N, 1)
    f2 = jnp.swapaxes(jnp.matmul(h, a[Fout:, :], precision=_HIGHEST), 1, 2)  # (B, 1, N)

    # Padding: padded rows/cols carry zero adjacency, so they are masked out
    # of every real row's softmax and contribute nothing (sliced off below).
    h_p = jnp.pad(h, ((0, 0), (0, Np - N), (0, Fp - Fout))).astype(compute_dtype)
    f1_p = jnp.pad(f1, ((0, 0), (0, Np - N), (0, 0)))
    f2_p = jnp.pad(f2, ((0, 0), (0, 0), (0, Np - N)))
    adj_m = jnp.pad(adj > 0, ((0, 0), (0, Np - N), (0, Np - N))).astype(jnp.int8)
    bias_p = jnp.pad(bias.astype(f32), ((0, 0), (0, Fp - Fout)))

    out = pl.pallas_call(
        _gat_kernel,
        out_shape=jax.ShapeDtypeStruct((B, Np, Fp), f32),
        grid=(B, n_q),
        in_specs=[
            pl.BlockSpec((pl.Squeezed(), Np, Fp), lambda b, q: (b, 0, 0)),      # h (batch-resident)
            pl.BlockSpec((pl.Squeezed(), tq_eff, 1), lambda b, q: (b, q, 0)),   # f1 row tile
            pl.BlockSpec((pl.Squeezed(), 1, Np), lambda b, q: (b, 0, 0)),       # f2 (batch-resident)
            pl.BlockSpec((pl.Squeezed(), tq_eff, Np), lambda b, q: (b, q, 0)),  # adj row tile (int8)
            pl.BlockSpec((1, Fp), lambda b, q: (0, 0)),                         # bias (padded)
        ],
        out_specs=pl.BlockSpec((pl.Squeezed(), tq_eff, Fp), lambda b, q: (b, q, 0)),
        compiler_params=pltpu.CompilerParams(
            dimension_semantics=("parallel", "parallel"),
            vmem_limit_bytes=_vmem_limit_bytes(),
        ),
    )(h_p, f1_p, f2_p, adj_m, bias_p)

    # TODO(synk): downstream consumers that accept padded (Np, Fp) activations
    # could skip this slice (it is one extra XLA copy).
    return out[:, :N, :Fout]


def _gat_reference(x, adj, W, a, bias):
    """Pure-JAX reference mirroring the PyTorch forward (eval mode)."""
    Fout = W.shape[1]
    h = jnp.matmul(x, W, precision=_HIGHEST)
    f1 = jnp.matmul(h, a[:Fout, :], precision=_HIGHEST)          # (B, N, 1)
    f2 = jnp.matmul(h, a[Fout:, :], precision=_HIGHEST)          # (B, N, 1)
    e = f1 + jnp.swapaxes(f2, 1, 2)
    e = jnp.where(e > 0, e, -0.2 * e)                            # LeakyReLU(slope=-0.2)
    logits = jnp.where(adj > 0, e, -9.0e15)
    att = jax.nn.softmax(logits, axis=2)
    h_prime = jnp.matmul(att, h, precision=_HIGHEST) + bias
    return jnp.where(h_prime > 0, h_prime, jnp.exp(h_prime) - 1.0)


def _xavier_uniform(key, shape, gain):
    fan_in, fan_out = shape[0], shape[1]
    bound = gain * np.sqrt(6.0 / (fan_in + fan_out))
    return jax.random.uniform(key, shape, jnp.float32, -bound, bound)


if __name__ == "__main__":
    def run_case(key, B, N, Fin, Fout, tq, compute_dtype, rtol, atol):
        gain = 1.414
        k_x, k_adj, k_w, k_a, k_b = jax.random.split(key, 5)
        W = _xavier_uniform(k_w, (Fin, Fout), gain)          # (in, out)
        a = _xavier_uniform(k_a, (2 * Fout, 1), gain)        # (2*out, 1)
        bias = _xavier_uniform(k_b, (1, Fout), gain)         # (1, out)

        x = jax.random.normal(k_x, (B, N, Fin), jnp.float32)
        adj = (jax.random.uniform(k_adj, (B, N, N)) > 0.4).astype(jnp.float32)
        adj = jnp.maximum(adj, jnp.eye(N, dtype=jnp.float32)[None, :, :])

        out = jax.block_until_ready(
            gat_layer(x, adj, W, a, bias, tq=tq, compute_dtype=compute_dtype))
        ref = _gat_reference(x, adj, W, a, bias)
        np.testing.assert_allclose(np.asarray(out), np.asarray(ref),
                                   rtol=rtol, atol=atol)

    key = jax.random.PRNGKey(0)
    k1, k2, k3 = jax.random.split(key, 3)
    # canonical small crowd-nav shape (single row tile, padded N and F), f32 path
    run_case(k1, B=2, N=12, Fin=16, Fout=32, tq=128,
             compute_dtype=jnp.float32, rtol=1e-3, atol=1e-4)
    # larger shape exercising the multi-tile row grid + key-axis padding, f32 path
    run_case(k2, B=2, N=320, Fin=16, Fout=32, tq=128,
             compute_dtype=jnp.float32, rtol=1e-3, atol=1e-4)
    # bf16 MXU path for the dominant att @ h matmul (f32 accumulation)
    run_case(k3, B=2, N=48, Fin=16, Fout=32, tq=128,
             compute_dtype=jnp.bfloat16, rtol=5e-2, atol=5e-2)

    print("KERNEL_OK")
</pallas_src>

<mosaic_0001>
module attributes {stable_mosaic.version = 11 : i64} {
  func.func @_gat_kernel(%arg0: i32, %arg1: i32, %arg2: memref<1x128x128xf32, #tpu.memory_space<vmem>>, %arg3: memref<1x128x1xf32, #tpu.memory_space<vmem>>, %arg4: memref<1x1x128xf32, #tpu.memory_space<vmem>>, %arg5: memref<1x128x128xi8, #tpu.memory_space<vmem>>, %arg6: memref<1x128xf32, #tpu.memory_space<vmem>>, %arg7: memref<1x128x128xf32, #tpu.memory_space<vmem>>) attributes {dimension_semantics = [#tpu.dimension_semantics<parallel>, #tpu.dimension_semantics<parallel>], iteration_bounds = array<i64: 2, 1>, scalar_prefetch = 0 : i64, scratch_operands = 0 : i64, tpu.core_type = #tpu.core_type<tc>, window_params = [{transform_indices = @transform_0, window_bounds = array<i64: 1, 128, 128>}, {transform_indices = @transform_1, window_bounds = array<i64: 1, 128, 1>}, {transform_indices = @transform_2, window_bounds = array<i64: 1, 1, 128>}, {transform_indices = @transform_3, window_bounds = array<i64: 1, 128, 128>}, {pipeline_mode = #tpu.pipeline_mode<synchronous>, transform_indices = @transform_4, window_bounds = array<i64: 1, 128>}, {transform_indices = @transform_5, window_bounds = array<i64: 1, 128, 128>}]} {
    %c0 = arith.constant 0 : index
    %c0_0 = arith.constant 0 : index
    %c0_1 = arith.constant 0 : index
    %0 = vector.load %arg3[%c0, %c0_0, %c0_1] : memref<1x128x1xf32, #tpu.memory_space<vmem>>, vector<1x128x1xf32>
    %1 = vector.shape_cast %0 : vector<1x128x1xf32> to vector<128x1xf32>
    %c0_2 = arith.constant 0 : index
    %c0_3 = arith.constant 0 : index
    %c0_4 = arith.constant 0 : index
    %2 = vector.load %arg4[%c0_2, %c0_3, %c0_4] : memref<1x1x128xf32, #tpu.memory_space<vmem>>, vector<1x1x128xf32>
    %3 = vector.shape_cast %2 : vector<1x1x128xf32> to vector<1x128xf32>
    %4 = vector.broadcast %1 : vector<128x1xf32> to vector<128x128xf32>
    %5 = vector.broadcast %3 : vector<1x128xf32> to vector<128x128xf32>
    %6 = arith.addf %4, %5 : vector<128x128xf32>
    %cst = arith.constant 0.000000e+00 : f32
    %7 = vector.broadcast %cst : f32 to vector<128x128xf32>
    %8 = arith.cmpf ogt, %6, %7 : vector<128x128xf32>
    %cst_5 = arith.constant -2.000000e-01 : f32
    %9 = vector.broadcast %cst_5 : f32 to vector<128x128xf32>
    %10 = arith.mulf %9, %6 : vector<128x128xf32>
    %11 = arith.select %8, %6, %10 : vector<128x128xi1>, vector<128x128xf32>
    %c0_6 = arith.constant 0 : index
    %c0_7 = arith.constant 0 : index
    %c0_8 = arith.constant 0 : index
    %12 = vector.load %arg5[%c0_6, %c0_7, %c0_8] : memref<1x128x128xi8, #tpu.memory_space<vmem>>, vector<1x128x128xi8>
    %13 = vector.shape_cast %12 : vector<1x128x128xi8> to vector<128x128xi8>
    %c0_i8 = arith.constant 0 : i8
    %14 = vector.broadcast %c0_i8 : i8 to vector<128x128xi8>
    %15 = arith.cmpi ne, %13, %14 : vector<128x128xi8>
    %cst_9 = arith.constant -9.000000e+15 : f32
    %16 = vector.broadcast %cst_9 : f32 to vector<128x128xf32>
    %17 = arith.select %15, %11, %16 : vector<128x128xi1>, vector<128x128xf32>
    %cst_10 = arith.constant dense<0xFF800000> : vector<128xf32>
    %18 = vector.multi_reduction <maximumf>, %17, %cst_10 [1] : vector<128x128xf32> to vector<128xf32>
    %19 = vector.shape_cast %18 : vector<128xf32> to vector<128x1xf32>
    %20 = vector.broadcast %19 : vector<128x1xf32> to vector<128x128xf32>
    %21 = arith.subf %17, %20 : vector<128x128xf32>
    %22 = math.exp %21 : vector<128x128xf32>
    %cst_11 = arith.constant dense<0.000000e+00> : vector<128xf32>
    %23 = vector.multi_reduction <add>, %22, %cst_11 [1] : vector<128x128xf32> to vector<128xf32>
    %24 = vector.shape_cast %23 : vector<128xf32> to vector<128x1xf32>
    %25 = vector.broadcast %24 : vector<128x1xf32> to vector<128x128xf32>
    %26 = arith.divf %22, %25 : vector<128x128xf32>
    %c0_12 = arith.constant 0 : index
    %c0_13 = arith.constant 0 : index
    %c0_14 = arith.constant 0 : index
    %27 = vector.load %arg2[%c0_12, %c0_13, %c0_14] : memref<1x128x128xf32, #tpu.memory_space<vmem>>, vector<1x128x128xf32>
    %28 = vector.shape_cast %27 : vector<1x128x128xf32> to vector<128x128xf32>
    %cst_15 = arith.constant dense<0.000000e+00> : vector<128x128xf32>
    %29 = tpu.matmul %26, %28, %cst_15 {dimension_numbers = #tpu.dot_dimension_numbers<[1], [0], [0], [1], [0, 0, 1, 1], [], []>} : vector<128x128xf32>, vector<128x128xf32>, vector<128x128xf32> -> vector<128x128xf32>
    %c0_16 = arith.constant 0 : index
    %c0_17 = arith.constant 0 : index
    %30 = vector.load %arg6[%c0_16, %c0_17] : memref<1x128xf32, #tpu.memory_space<vmem>>, vector<1x128xf32>
    %31 = vector.broadcast %30 : vector<1x128xf32> to vector<128x128xf32>
    %32 = arith.addf %29, %31 : vector<128x128xf32>
    %cst_18 = arith.constant 0.000000e+00 : f32
    %33 = vector.broadcast %cst_18 : f32 to vector<128x128xf32>
    %34 = arith.minimumf %32, %33 : vector<128x128xf32>
    %35 = math.exp %34 : vector<128x128xf32>
    %cst_19 = arith.constant 1.000000e+00 : f32
    %36 = vector.broadcast %cst_19 : f32 to vector<128x128xf32>
    %37 = arith.subf %35, %36 : vector<128x128xf32>
    %cst_20 = arith.constant 0.000000e+00 : f32
    %38 = vector.broadcast %cst_20 : f32 to vector<128x128xf32>
    %39 = arith.cmpf ogt, %32, %38 : vector<128x128xf32>
    %40 = arith.select %39, %32, %37 : vector<128x128xi1>, vector<128x128xf32>
    %c0_21 = arith.constant 0 : index
    %c0_22 = arith.constant 0 : index
    %c0_23 = arith.constant 0 : index
    %41 = vector.load %arg7[%c0_21, %c0_22, %c0_23] : memref<1x128x128xf32, #tpu.memory_space<vmem>>, vector<1x128x128xf32>
    %42 = vector.shape_cast %41 : vector<1x128x128xf32> to vector<128x128xf32>
    %43 = vector.shape_cast %40 : vector<128x128xf32> to vector<1x128x128xf32>
    tpu.vector_store %arg7[%c0_21, %c0_22, %c0_23], %43 {strides = array<i32>} : memref<1x128x128xf32, #tpu.memory_space<vmem>>, vector<1x128x128xf32>,
    return
  }
  func.func @transform_0(%arg0: i32, %arg1: i32) -> (i32, i32, i32) {
    %c0_i32 = arith.constant 0 : i32
    %c0_i32_0 = arith.constant 0 : i32
    %c0_i32_1 = arith.constant 0 : i32
    return %arg0, %c0_i32, %c0_i32_0 : i32, i32, i32
  }
  func.func @transform_1(%arg0: i32, %arg1: i32) -> (i32, i32, i32) {
    %c0_i32 = arith.constant 0 : i32
    %c0_i32_0 = arith.constant 0 : i32
    return %arg0, %arg1, %c0_i32 : i32, i32, i32
  }
  func.func @transform_2(%arg0: i32, %arg1: i32) -> (i32, i32, i32) {
    %c0_i32 = arith.constant 0 : i32
    %c0_i32_0 = arith.constant 0 : i32
    %c0_i32_1 = arith.constant 0 : i32
    return %arg0, %c0_i32, %c0_i32_0 : i32, i32, i32
  }
  func.func @transform_3(%arg0: i32, %arg1: i32) -> (i32, i32, i32) {
    %c0_i32 = arith.constant 0 : i32
    %c0_i32_0 = arith.constant 0 : i32
    return %arg0, %arg1, %c0_i32 : i32, i32, i32
  }
  func.func @transform_4(%arg0: i32, %arg1: i32) -> (i32, i32) {
    %c0_i32 = arith.constant 0 : i32
    %c0_i32_0 = arith.constant 0 : i32
    %c0_i32_1 = arith.constant 0 : i32
    return %c0_i32, %c0_i32_0 : i32, i32
  }
  func.func @transform_5(%arg0: i32, %arg1: i32) -> (i32, i32, i32) {
    %c0_i32 = arith.constant 0 : i32
    %c0_i32_0 = arith.constant 0 : i32
    return %arg0, %arg1, %c0_i32 : i32, i32, i32
  }
}

</mosaic_0001>

<llo_original>
// kernel: tpu_custom_call.1
$region0: #{tpu_custom_call.1}
  #allocation0 [shape = 'u32[]', space=smem, size = 0x4, offset = 0x4, fixed_abs, tag = 'smem constant byte address 0x4 - core index']
  #allocation1 [shape = 'u32[72,128]{1,0:T(1,128)}', space=vmem, size = 0x9000, scoped, tag = 'internal scratch']
  %s0 = inlined_call_operand.vmem [shape: f32[2,128,128], index: 0, kind: input, shape index: {}]
  %s1 = inlined_call_operand.vmem [shape: f32[2,128,1], index: 1, kind: input, shape index: {}]
  %s2 = inlined_call_operand.vmem [shape: f32[2,1,128], index: 2, kind: input, shape index: {}]
  %s3 = inlined_call_operand.hbm [shape: s8[2,128,128], index: 3, kind: input, shape index: {}]
  %s4 = inlined_call_operand.vmem [shape: f32[1,128], index: 4, kind: input, shape index: {}]
  %s5 = inlined_call_operand.hbm [shape: f32[2,128,128], index: 5, kind: output, shape index: {}]
  %s6 = sld [smem:[#allocation0]]
  $region57: #{tpu_custom_call.1} parent=0
    _
  %s8 = ssub.s32 1, %s6
  %s9 = scalar_select 0, %s8, %s6
  $region1: #{tpu_custom_call.1} parent=0
    #allocation2 [shape = 'u8[32768]{0}', space=vmem, size = 0x8000, scoped, tag = 'input window, operand 3']
    #allocation3 [shape = 's32[2]{0}', space=sflag, size = 0x8, scoped, tag = 'scoped memory for tpu_custom_call.1']
    #allocation4 [shape = 's32[2]{0}', space=sflag, size = 0x8, scoped, tag = 'scoped memory for tpu_custom_call.1']
    #allocation5 [shape = 'u8[131072]{0}', space=vmem, size = 0x20000, scoped, tag = 'output window, operand 0']
    %10 = vsyncpa [#allocation3], 0
    %s11 = scalar_lea.sflag [#allocation3], 1
    %12 = vsyncpa %s11, 0
    %13 = vsyncpa [#allocation4], 0
    %s14 = scalar_lea.sflag [#allocation4], 1
    %15 = vsyncpa %s14, 0
    loop: start=0, step=1, limit=4
    $region2: #{tpu_custom_call.1} parent=1 // loop_pre_header
      _
    $region3: #{tpu_custom_call.1} parent=1 // loop_header
      %s17 = sphi 0, %s21
      %p18 = scmp.ge.s32.totalorder %s17, 4
      %s24 = sphi 0, %s36
      %s25 = sphi 0, %s32
      %s26 = sphi 0, %s24
      %s27 = sphi 0, %s25
      %s28 = sphi 0, %s26
      %s29 = sphi 0, %s27
      %s39 = sphi 0, %s41
      %s42 = sphi 0, %s39
      %s43 = sphi 0, %s42
      %s59 = sphi 0, %s43
      %s67 = sphi 0, %s69
      %s70 = sphi 0, %s67
      %s71 = sphi 0, %s70
      %s87 = sphi 0, %s71
      %s93 = sphi 0, %s95
      %s96 = sphi 0, %s93
      %s97 = sphi 0, %s96
      %s113 = sphi 0, %s97
      %s121 = sphi 0, %s123
      %s124 = sphi 0, %s121
      %s125 = sphi 0, %s124
      %s141 = sphi 0, %s125
      %s145 = sphi 0, %s145
      %s147 = sphi 0, %s145
      %s148 = sphi 0, %s147
      %s162 = sphi 0, %s148
      %s170 = sphi 0, %s172
      %s173 = sphi 0, %s170
      %s174 = sphi 0, %s173
      %s190 = sphi 0, %s174
    $region4: #{tpu_custom_call.1} parent=1 // loop_header_branch
      %20 = sbr.rel (%p18) target = $region8
    $region5: #{tpu_custom_call.1} parent=1 // loop_body
      %s22 = ssub.s32 %s17, 1
      %s23 = ssub.s32 %s17, 2
      %s30 = sadd.s32 1, %s25
      %p31 = scmp.ge.s32.totalorder %s30, 1
      %s32 = scalar_select %p31, 0, %s30
      %s33 = sadd.s32 1, %s24
      %s34 = scalar_select %p31, %s33, %s24
      %p35 = scmp.ge.s32.totalorder %s34, 2
      %s36 = scalar_select %p35, 0, %s34
      %s37 = ssub.s32 %s24, %s36
      %p38 = scmp.eq.s32.totalorder %s37, 0
      %s40 = sadd.s32 %s39, 1
      %s41 = scalar_select %p38, %s39, %s40
      %p44 = pneg %p38
      %p45 = scmp.eq.s32.totalorder %s17, 1
      %p46 = por %p44, %p45
      %p47 = scmp.ne.s32.totalorder %s39, %s42
      %p48 = scmp.eq.s32.totalorder %s17, 0
      %p49 = por %p47, %p48
      %p50 = scmp.ne.s32.totalorder %s39, %s42
      %p51 = scmp.eq.s32.totalorder %s22, 1
      %p52 = por %p50, %p51
      %p53 = scmp.ne.s32.totalorder %s42, %s43
      %p54 = scmp.eq.s32.totalorder %s22, 0
      %p55 = por %p53, %p54
      %p56 = scmp.ne.s32.totalorder %s42, %s43
      %p57 = scmp.eq.s32.totalorder %s23, 1
      %p58 = por %p56, %p57
      %p60 = scmp.ne.s32.totalorder %s43, %s59
      %p61 = scmp.eq.s32.totalorder %s23, 0
      %p62 = por %p60, %p61
      %s63 = ssub.s32 %s24, %s36
      %s64 = ssub.s32 %s25, %s32
      %s65 = sor.u32 %s63, %s64
      %p66 = scmp.eq.s32.totalorder %s65, 0
      %s68 = sadd.s32 %s67, 1
      %s69 = scalar_select %p66, %s67, %s68
      %p72 = pneg %p66
      %p73 = scmp.eq.s32.totalorder %s17, 1
      %p74 = por %p72, %p73
      %p75 = scmp.ne.s32.totalorder %s67, %s70
      %p76 = scmp.eq.s32.totalorder %s17, 0
      %p77 = por %p75, %p76
      %p78 = scmp.ne.s32.totalorder %s67, %s70
      %p79 = scmp.eq.s32.totalorder %s22, 1
      %p80 = por %p78, %p79
      %p81 = scmp.ne.s32.totalorder %s70, %s71
      %p82 = scmp.eq.s32.totalorder %s22, 0
      %p83 = por %p81, %p82
      %p84 = scmp.ne.s32.totalorder %s70, %s71
      %p85 = scmp.eq.s32.totalorder %s23, 1
      %p86 = por %p84, %p85
      %p88 = scmp.ne.s32.totalorder %s71, %s87
      %p89 = scmp.eq.s32.totalorder %s23, 0
      %p90 = por %p88, %p89
      %s91 = ssub.s32 %s24, %s36
      %p92 = scmp.eq.s32.totalorder %s91, 0
      %s94 = sadd.s32 %s93, 1
      %s95 = scalar_select %p92, %s93, %s94
      %p98 = pneg %p92
      %p99 = scmp.eq.s32.totalorder %s17, 1
      %p100 = por %p98, %p99
      %p101 = scmp.ne.s32.totalorder %s93, %s96
      %p102 = scmp.eq.s32.totalorder %s17, 0
      %p103 = por %p101, %p102
      %p104 = scmp.ne.s32.totalorder %s93, %s96
      %p105 = scmp.eq.s32.totalorder %s22, 1
      %p106 = por %p104, %p105
      %p107 = scmp.ne.s32.totalorder %s96, %s97
      %p108 = scmp.eq.s32.totalorder %s22, 0
      %p109 = por %p107, %p108
      %p110 = scmp.ne.s32.totalorder %s96, %s97
      %p111 = scmp.eq.s32.totalorder %s23, 1
      %p112 = por %p110, %p111
      %p114 = scmp.ne.s32.totalorder %s97, %s113
      %p115 = scmp.eq.s32.totalorder %s23, 0
      %p116 = por %p114, %p115
      %s117 = ssub.s32 %s24, %s36
      %s118 = ssub.s32 %s25, %s32
      %s119 = sor.u32 %s117, %s118
      %p120 = scmp.eq.s32.totalorder %s119, 0
      %s122 = sadd.s32 %s121, 1
      %s123 = scalar_select %p120, %s121, %s122
      %p126 = pneg %p120
      %p127 = scmp.eq.s32.totalorder %s17, 1
      %p128 = por %p126, %p127
      %p129 = scmp.ne.s32.totalorder %s121, %s124
      %p130 = scmp.eq.s32.totalorder %s17, 0
      %p131 = por %p129, %p130
      %p132 = scmp.ne.s32.totalorder %s121, %s124
      %p133 = scmp.eq.s32.totalorder %s22, 1
      %p134 = por %p132, %p133
      %p135 = scmp.ne.s32.totalorder %s124, %s125
      %p136 = scmp.eq.s32.totalorder %s22, 0
      %p137 = por %p135, %p136
      %p138 = scmp.ne.s32.totalorder %s124, %s125
      %p139 = scmp.eq.s32.totalorder %s23, 1
      %p140 = por %p138, %p139
      %p142 = scmp.ne.s32.totalorder %s125, %s141
      %p143 = scmp.eq.s32.totalorder %s23, 0
      %p144 = por %p142, %p143
      %s146 = sadd.s32 %s145, 1
      %p149 = scmp.eq.s32.totalorder %s17, 1
      %p150 = scmp.ne.s32.totalorder %s145, %s147
      %p151 = scmp.eq.s32.totalorder %s17, 0
      %p152 = por %p150, %p151
      %p153 = scmp.ne.s32.totalorder %s145, %s147
      %p154 = scmp.eq.s32.totalorder %s22, 1
      %p155 = por %p153, %p154
      %p156 = scmp.ne.s32.totalorder %s147, %s148
      %p157 = scmp.eq.s32.totalorder %s22, 0
      %p158 = por %p156, %p157
      %p159 = scmp.ne.s32.totalorder %s147, %s148
      %p160 = scmp.eq.s32.totalorder %s23, 1
      %p161 = por %p159, %p160
      %p163 = scmp.ne.s32.totalorder %s148, %s162
      %p164 = scmp.eq.s32.totalorder %s23, 0
      %p165 = por %p163, %p164
      %s166 = ssub.s32 %s24, %s36
      %s167 = ssub.s32 %s25, %s32
      %s168 = sor.u32 %s166, %s167
      %p169 = scmp.eq.s32.totalorder %s168, 0
      %s171 = sadd.s32 %s170, 1
      %s172 = scalar_select %p169, %s170, %s171
      %p175 = pneg %p169
      %p176 = scmp.eq.s32.totalorder %s17, 1
      %p177 = por %p175, %p176
      %p178 = scmp.ne.s32.totalorder %s170, %s173
      %p179 = scmp.eq.s32.totalorder %s17, 0
      %p180 = por %p178, %p179
      %p181 = scmp.ne.s32.totalorder %s170, %s173
      %p182 = scmp.eq.s32.totalorder %s22, 1
      %p183 = por %p181, %p182
      %p184 = scmp.ne.s32.totalorder %s173, %s174
      %p185 = scmp.eq.s32.totalorder %s22, 0
      %p186 = por %p184, %p185
      %p187 = scmp.ne.s32.totalorder %s173, %s174
      %p188 = scmp.eq.s32.totalorder %s23, 1
      %p189 = por %p187, %p188
      %p191 = scmp.ne.s32.totalorder %s174, %s190
      %p192 = scmp.eq.s32.totalorder %s23, 0
      %p193 = por %p191, %p192
      %p194 = scmp.le.s32.totalorder 1, %s17
      %p195 = scmp.lt.s32.totalorder %s17, 3
      %p196 = pnand %p194, %p195
      %p197 = pneg %p196
      // Predicated region
      $region9: #{tpu_custom_call.1} parent=5 // pred_check
        _
      $region10: #{tpu_custom_call.1} parent=5 // pred_check_branch
        %199 = sbr.rel (%p196) target = $region12
      $region11: #{tpu_custom_call.1} parent=5 // pred_region
        %s200 = ssub.s32 %s17, 1
        // Predicated region
        $region13: #{tpu_custom_call.1} parent=11 // pred_check
          %p201 = pneg %p158
        $region14: #{tpu_custom_call.1} parent=11 // pred_check_branch
          %203 = sbr.rel (%p201) target = $region16
        $region15: #{tpu_custom_call.1} parent=11 // pred_region
          _
        $region16: #{tpu_custom_call.1} parent=11 // pred_fallthru
          _
      $region12: #{tpu_custom_call.1} parent=5 // pred_fallthru
        _
      %p204 = scmp.lt.s32.totalorder %s17, 2
      // Predicated region
      $region17: #{tpu_custom_call.1} parent=5 // pred_check
        %p205 = pneg %p204
      $region18: #{tpu_custom_call.1} parent=5 // pred_check_branch
        %207 = sbr.rel (%p205) target = $region20
      $region19: #{tpu_custom_call.1} parent=5 // pred_region
        // Predicated region
        $region21: #{tpu_custom_call.1} parent=19 // pred_check
          %p208 = pneg %p49
        $region22: #{tpu_custom_call.1} parent=19 // pred_check_branch
          %210 = sbr.rel (%p208) target = $region24
        $region23: #{tpu_custom_call.1} parent=19 // pred_region
          %p211 = scmp.lt.s32.totalorder %s24, 1
          %s212 = scalar_select %p211, %s24, 1
          %s213 = smul.addr %s212, 16
          %s214 = smul.addr %s213, 8
          %s215 = scalar_lea.vmem %s0, %s214
        $region24: #{tpu_custom_call.1} parent=19 // pred_fallthru
          _
        // Predicated region
        $region25: #{tpu_custom_call.1} parent=19 // pred_check
          %p216 = pneg %p77
        $region26: #{tpu_custom_call.1} parent=19 // pred_check_branch
          %218 = sbr.rel (%p216) target = $region28
        $region27: #{tpu_custom_call.1} parent=19 // pred_region
          %s219 = smul.u32 16, %s25
          %p220 = scmp.lt.s32.totalorder %s24, 1
          %s221 = scalar_select %p220, %s24, 1
          %p222 = scmp.lt.s32.totalorder %s219, 15
          %s223 = scalar_select %p222, %s219, 15
          %s224 = smul.addr %s221, 16
          %s225 = sadd.s32 %s223, %s224
          %s226 = smul.addr %s225, 8
          %s227 = scalar_lea.vmem %s1, %s226
          %s228 = smul.u32 16, %s25
        $region28: #{tpu_custom_call.1} parent=19 // pred_fallthru
          _
        // Predicated region
        $region29: #{tpu_custom_call.1} parent=19 // pred_check
          %p229 = pneg %p103
        $region30: #{tpu_custom_call.1} parent=19 // pred_check_branch
          %231 = sbr.rel (%p229) target = $region32
        $region31: #{tpu_custom_call.1} parent=19 // pred_region
          %p232 = scmp.lt.s32.totalorder %s24, 1
          %s233 = scalar_select %p232, %s24, 1
          %s234 = scalar_lea.vmem %s2, %s233
        $region32: #{tpu_custom_call.1} parent=19 // pred_fallthru
          _
        // Predicated region
        $region33: #{tpu_custom_call.1} parent=19 // pred_check
          %p235 = pneg %p131
        $region34: #{tpu_custom_call.1} parent=19 // pred_check_branch
          %237 = sbr.rel (%p235) target = $region36
        $region35: #{tpu_custom_call.1} parent=19 // pred_region
          %s238 = sand.u32 %s121, 1
          %s239 = scalar_lea.sflag [#allocation3], %s238
          %s240 = sand.u32 %s121, 1
          %s241 = smul.addr %s240, 32
          %s242 = scalar_lea.vmem [#allocation2], %s241
          %s243 = smul.u32 4, %s25
          %245 = vsyncadd %s239, 0
          %s246 = smul.addr %s24, 4
          %s247 = sadd.s32 %s243, %s246
          %s248 = smul.addr %s247, 8
          %s249 = scalar_lea.hbm %s3, %s248
          %s250 = sshll.u32 %s249, 4
          %s251 = int_to_ptr.hbm [resolvable:$true] %s250
          %s252 = sshll.u32 %s242, 4
          %s253 = int_to_ptr.vmem [resolvable:$true] %s252
          %258 = dma.hbm_to_vmem [thread:$0]  %s251, 512, %s253, %s239, 128, 128, 8
        $region36: #{tpu_custom_call.1} parent=19 // pred_fallthru
          _
      $region20: #{tpu_custom_call.1} parent=5 // pred_fallthru
        _
      %p259 = scmp.le.s32.totalorder 1, %s17
      %p260 = scmp.lt.s32.totalorder %s17, 3
      %p261 = pnand %p259, %p260
      %p262 = pneg %p261
      // Predicated region
      $region37: #{tpu_custom_call.1} parent=5 // pred_check
        _
      $region38: #{tpu_custom_call.1} parent=5 // pred_check_branch
        %264 = sbr.rel (%p261) target = $region40
      $region39: #{tpu_custom_call.1} parent=5 // pred_region
        %s265 = ssub.s32 %s17, 1
        %s266 = sand.u32 %s124, 1
        %s267 = scalar_lea.sflag [#allocation3], %s266
        %s268 = sand.u32 %s124, 1
        %s269 = smul.addr %s268, 32
        %s270 = scalar_lea.vmem [#allocation2], %s269
        // Predicated region
        $region41: #{tpu_custom_call.1} parent=39 // pred_check
          %p271 = pneg %p137
        $region42: #{tpu_custom_call.1} parent=39 // pred_check_branch
          %273 = sbr.rel (%p271) target = $region44
        $region43: #{tpu_custom_call.1} parent=39 // pred_region
          %275 = dma.done %s267, 512
        $region44: #{tpu_custom_call.1} parent=39 // pred_fallthru
          _
        %p276 = scmp.lt.s32.totalorder %s26, 1
        %s277 = scalar_select %p276, %s26, 1
        %s278 = smul.addr %s277, 16
        %s279 = smul.addr %s278, 8
        %s280 = scalar_lea.vmem %s0, %s279
        %p281 = pneg %p55
        %p282 = pneg %p52
        %s283 = smul.u32 16, %s27
        %p284 = scmp.lt.s32.totalorder %s26, 1
        %s285 = scalar_select %p284, %s26, 1
        %p286 = scmp.lt.s32.totalorder %s283, 15
        %s287 = scalar_select %p286, %s283, 15
        %s288 = smul.addr %s285, 16
        %s289 = sadd.s32 %s287, %s288
        %s290 = smul.addr %s289, 8
        %s291 = scalar_lea.vmem %s1, %s290
        %p292 = pneg %p83
        %p293 = pneg %p80
        %p294 = scmp.lt.s32.totalorder %s26, 1
        %s295 = scalar_select %p294, %s26, 1
        %s296 = scalar_lea.vmem %s2, %s295
        %p297 = pneg %p109
        %p298 = pneg %p106
        %s299 = sand.u32 %s124, 1
        %s300 = scalar_lea.sflag [#allocation3], %s299
        %s301 = sand.u32 %s124, 1
        %s302 = smul.addr %s301, 32
        %s303 = scalar_lea.vmem [#allocation2], %s302
        %p304 = pneg %p137
        %p305 = pneg %p134
        %p306 = pneg %p158
        %p307 = pneg %p155
        %p308 = pneg %p186
        %p309 = pneg %p183
        %s310 = sand.u32 %s173, 1
        %s311 = scalar_lea.sflag [#allocation4], %s310
        %s312 = sand.u32 %s173, 1
        %s313 = smul.addr %s312, 128
        %s314 = scalar_lea.vmem [#allocation5], %s313
        %p315 = scmp.lt.s32.totalorder %s26, 1
        %s316 = scalar_select %p315, %s26, 1
        %s317 = smul.addr %s316, 16
        %s318 = smul.addr %s317, 8
        %s319 = scalar_lea.vmem %s0, %s318
        %s320 = smul.u32 16, %s27
        %p321 = scmp.lt.s32.totalorder %s26, 1
        %s322 = scalar_select %p321, %s26, 1
        %p323 = scmp.lt.s32.totalorder %s320, 15
        %s324 = scalar_select %p323, %s320, 15
        %s325 = smul.addr %s322, 16
        %s326 = sadd.s32 %s324, %s325
        %s327 = smul.addr %s326, 8
        %s328 = scalar_lea.vmem %s1, %s327
        %s329 = smul.u32 16, %s27
        %p330 = scmp.lt.s32.totalorder %s26, 1
        %s331 = scalar_select %p330, %s26, 1
        %s332 = scalar_lea.vmem %s2, %s331
        %s333 = smul.u32 4, %s27
        %s334 = smul.u32 16, %s27
        %v337 = vld [vmem:[%s328] sm:$0xff]
        %v338 = vld [vmem:[%s328 + $0x8] sm:$0xff]
        %v339 = vld [vmem:[%s328 + $0x10] sm:$0xff]
        %v340 = vld [vmem:[%s328 + $0x18] sm:$0xff]
        %v341 = vld [vmem:[%s328 + $0x20] sm:$0xff]
        %v342 = vld [vmem:[%s328 + $0x28] sm:$0xff]
        %v343 = vld [vmem:[%s328 + $0x30] sm:$0xff]
        %v344 = vld [vmem:[%s328 + $0x38] sm:$0xff]
        %v345 = vld [vmem:[%s328 + $0x40] sm:$0xff]
        %v346 = vld [vmem:[%s328 + $0x48] sm:$0xff]
        %v347 = vld [vmem:[%s328 + $0x50] sm:$0xff]
        %v348 = vld [vmem:[%s328 + $0x58] sm:$0xff]
        %v349 = vld [vmem:[%s328 + $0x60] sm:$0xff]
        %v350 = vld [vmem:[%s328 + $0x68] sm:$0xff]
        %v351 = vld [vmem:[%s328 + $0x70] sm:$0xff]
        %v352 = vld [vmem:[%s328 + $0x78] sm:$0xff]
        %v353 = vld [vmem:[%s332] sm:$0x1]
        %355 = vset.pattern.permute.xlu0 0
        %356 = vperm.xlu0 %355, %v337
        %v357 = vpop.permute.xlu0 %356
        %360 = vset.pattern.permute.xlu0 0
        %361 = vperm.xlu0 %360, %v338
        %v362 = vpop.permute.xlu0 %361
        %365 = vset.pattern.permute.xlu0 0
        %366 = vperm.xlu0 %365, %v339
        %v367 = vpop.permute.xlu0 %366
        %370 = vset.pattern.permute.xlu0 0
        %371 = vperm.xlu0 %370, %v340
        %v372 = vpop.permute.xlu0 %371
        %375 = vset.pattern.permute.xlu0 0
        %376 = vperm.xlu0 %375, %v341
        %v377 = vpop.permute.xlu0 %376
        %380 = vset.pattern.permute.xlu0 0
        %381 = vperm.xlu0 %380, %v342
        %v382 = vpop.permute.xlu0 %381
        %385 = vset.pattern.permute.xlu0 0
        %386 = vperm.xlu0 %385, %v343
        %v387 = vpop.permute.xlu0 %386
        %390 = vset.pattern.permute.xlu0 0
        %391 = vperm.xlu0 %390, %v344
        %v392 = vpop.permute.xlu0 %391
        %395 = vset.pattern.permute.xlu0 0
        %396 = vperm.xlu0 %395, %v345
        %v397 = vpop.permute.xlu0 %396
        %400 = vset.pattern.permute.xlu0 0
        %401 = vperm.xlu0 %400, %v346
        %v402 = vpop.permute.xlu0 %401
        %405 = vset.pattern.permute.xlu0 0
        %406 = vperm.xlu0 %405, %v347
        %v407 = vpop.permute.xlu0 %406
        %410 = vset.pattern.permute.xlu0 0
        %411 = vperm.xlu0 %410, %v348
        %v412 = vpop.permute.xlu0 %411
        %415 = vset.pattern.permute.xlu0 0
        %416 = vperm.xlu0 %415, %v349
        %v417 = vpop.permute.xlu0 %416
        %420 = vset.pattern.permute.xlu0 0
        %421 = vperm.xlu0 %420, %v350
        %v422 = vpop.permute.xlu0 %421
        %425 = vset.pattern.permute.xlu0 0
        %426 = vperm.xlu0 %425, %v351
        %v427 = vpop.permute.xlu0 %426
        %430 = vset.pattern.permute.xlu0 0
        %431 = vperm.xlu0 %430, %v352
        %v432 = vpop.permute.xlu0 %431
        %v435 = vperm.slane %v353, 0
        %v437 = vadd.f32 %v357, %v435
        %v438 = vadd.f32 %v362, %v435
        %v439 = vadd.f32 %v367, %v435
        %v440 = vadd.f32 %v372, %v435
        %v441 = vadd.f32 %v377, %v435
        %v442 = vadd.f32 %v382, %v435
        %v443 = vadd.f32 %v387, %v435
        %v444 = vadd.f32 %v392, %v435
        %v445 = vadd.f32 %v397, %v435
        %v446 = vadd.f32 %v402, %v435
        %v447 = vadd.f32 %v407, %v435
        %v448 = vadd.f32 %v412, %v435
        %v449 = vadd.f32 %v417, %v435
        %v450 = vadd.f32 %v422, %v435
        %v451 = vadd.f32 %v427, %v435
        %v452 = vadd.f32 %v432, %v435
        %vm453 = vcmp.gt.f32.partialorder %v437, 0.0
        %vm454 = vcmp.gt.f32.partialorder %v438, 0.0
        %vm455 = vcmp.gt.f32.partialorder %v439, 0.0
        %vm456 = vcmp.gt.f32.partialorder %v440, 0.0
        %vm457 = vcmp.gt.f32.partialorder %v441, 0.0
        %vm458 = vcmp.gt.f32.partialorder %v442, 0.0
        %vm459 = vcmp.gt.f32.partialorder %v443, 0.0
        %vm460 = vcmp.gt.f32.partialorder %v444, 0.0
        %vm461 = vcmp.gt.f32.partialorder %v445, 0.0
        %vm462 = vcmp.gt.f32.partialorder %v446, 0.0
        %vm463 = vcmp.gt.f32.partialorder %v447, 0.0
        %vm464 = vcmp.gt.f32.partialorder %v448, 0.0
        %vm465 = vcmp.gt.f32.partialorder %v449, 0.0
        %vm466 = vcmp.gt.f32.partialorder %v450, 0.0
        %vm467 = vcmp.gt.f32.partialorder %v451, 0.0
        %vm468 = vcmp.gt.f32.partialorder %v452, 0.0
        %v469 = vmul.f32 %v437, -0.2
        %v470 = vmul.f32 %v438, -0.2
        %v471 = vmul.f32 %v439, -0.2
        %v472 = vmul.f32 %v440, -0.2
        %v473 = vmul.f32 %v441, -0.2
        %v474 = vmul.f32 %v442, -0.2
        %v475 = vmul.f32 %v443, -0.2
        %v476 = vmul.f32 %v444, -0.2
        %v477 = vmul.f32 %v445, -0.2
        %v478 = vmul.f32 %v446, -0.2
        %v479 = vmul.f32 %v447, -0.2
        %v480 = vmul.f32 %v448, -0.2
        %v481 = vmul.f32 %v449, -0.2
        %v482 = vmul.f32 %v450, -0.2
        %v483 = vmul.f32 %v451, -0.2
        %v484 = vmul.f32 %v452, -0.2
        %v485 = vsel %vm453, %v437, %v469
        %v486 = vsel %vm454, %v438, %v470
        %v487 = vsel %vm455, %v439, %v471
        %v488 = vsel %vm456, %v440, %v472
        %v489 = vsel %vm457, %v441, %v473
        %v490 = vsel %vm458, %v442, %v474
        %v491 = vsel %vm459, %v443, %v475
        %v492 = vsel %vm460, %v444, %v476
        %v493 = vsel %vm461, %v445, %v477
        %v494 = vsel %vm462, %v446, %v478
        %v495 = vsel %vm463, %v447, %v479
        %v496 = vsel %vm464, %v448, %v480
        %v497 = vsel %vm465, %v449, %v481
        %v498 = vsel %vm466, %v450, %v482
        %v499 = vsel %vm467, %v451, %v483
        %v500 = vsel %vm468, %v452, %v484
        %v501 = vld [vmem:[%s270] sm:$0xff]
        %v502 = vld [vmem:[%s270 + $0x8] sm:$0xff]
        %v503 = vld [vmem:[%s270 + $0x10] sm:$0xff]
        %v504 = vld [vmem:[%s270 + $0x18] sm:$0xff]
        %vm505 = vnez %v501
        %vm506 = vnez %v502
        %vm507 = vnez %v503
        %vm508 = vnez %v504
        %v509 = vsel %vm505, 16843009, 0
        %v510 = vsel %vm506, 16843009, 0
        %v511 = vsel %vm507, 16843009, 0
        %v512 = vsel %vm508, 16843009, 0
        %v513 = vunpack.c.0.s8 %v509
        %v514 = vunpack.c.1.s8 %v509
        %v515 = vunpack.c.2.s8 %v509
        %v516 = vunpack.c.3.s8 %v509
        %v517 = vunpack.c.0.s8 %v510
        %v518 = vunpack.c.1.s8 %v510
        %v519 = vunpack.c.2.s8 %v510
        %v520 = vunpack.c.3.s8 %v510
        %v521 = vunpack.c.0.s8 %v511
        %v522 = vunpack.c.1.s8 %v511
        %v523 = vunpack.c.2.s8 %v511
        %v524 = vunpack.c.3.s8 %v511
        %v525 = vunpack.c.0.s8 %v512
        %v526 = vunpack.c.1.s8 %v512
        %v527 = vunpack.c.2.s8 %v512
        %v528 = vunpack.c.3.s8 %v512
        %v529 = vpack.c.b16 %v513, %v513
        %v530 = vpack.c.b8 %v529, %v529
        %v531 = vpack.c.b16 %v514, %v514
        %v532 = vpack.c.b8 %v531, %v531
        %v533 = vpack.c.b16 %v515, %v515
        %v534 = vpack.c.b8 %v533, %v533
        %v535 = vpack.c.b16 %v516, %v516
        %v536 = vpack.c.b8 %v535, %v535
        %v537 = vpack.c.b16 %v517, %v517
        %v538 = vpack.c.b8 %v537, %v537
        %v539 = vpack.c.b16 %v518, %v518
        %v540 = vpack.c.b8 %v539, %v539
        %v541 = vpack.c.b16 %v519, %v519
        %v542 = vpack.c.b8 %v541, %v541
        %v543 = vpack.c.b16 %v520, %v520
        %v544 = vpack.c.b8 %v543, %v543
        %v545 = vpack.c.b16 %v521, %v521
        %v546 = vpack.c.b8 %v545, %v545
        %v547 = vpack.c.b16 %v522, %v522
        %v548 = vpack.c.b8 %v547, %v547
        %v549 = vpack.c.b16 %v523, %v523
        %v550 = vpack.c.b8 %v549, %v549
        %v551 = vpack.c.b16 %v524, %v524
        %v552 = vpack.c.b8 %v551, %v551
        %v553 = vpack.c.b16 %v525, %v525
        %v554 = vpack.c.b8 %v553, %v553
        %v555 = vpack.c.b16 %v526, %v526
        %v556 = vpack.c.b8 %v555, %v555
        %v557 = vpack.c.b16 %v527, %v527
        %v558 = vpack.c.b8 %v557, %v557
        %v559 = vpack.c.b16 %v528, %v528
        %v560 = vpack.c.b8 %v559, %v559
        %vm561 = vnez %v530
        %vm562 = vnez %v532
        %vm563 = vnez %v534
        %vm564 = vnez %v536
        %vm565 = vnez %v538
        %vm566 = vnez %v540
        %vm567 = vnez %v542
        %vm568 = vnez %v544
        %vm569 = vnez %v546
        %vm570 = vnez %v548
        %vm571 = vnez %v550
        %vm572 = vnez %v552
        %vm573 = vnez %v554
        %vm574 = vnez %v556
        %vm575 = vnez %v558
        %vm576 = vnez %v560
        %v577 = vsel %vm561, 16843009, 0
        %v578 = vsel %vm562, 16843009, 0
        %v579 = vsel %vm563, 16843009, 0
        %v580 = vsel %vm564, 16843009, 0
        %v581 = vsel %vm565, 16843009, 0
        %v582 = vsel %vm566, 16843009, 0
        %v583 = vsel %vm567, 16843009, 0
        %v584 = vsel %vm568, 16843009, 0
        %v585 = vsel %vm569, 16843009, 0
        %v586 = vsel %vm570, 16843009, 0
        %v587 = vsel %vm571, 16843009, 0
        %v588 = vsel %vm572, 16843009, 0
        %v589 = vsel %vm573, 16843009, 0
        %v590 = vsel %vm574, 16843009, 0
        %v591 = vsel %vm575, 16843009, 0
        %v592 = vsel %vm576, 16843009, 0
        %v593 = vunpack.c.0.s8 %v577
        %v594 = vunpack.c.0.s8 %v578
        %v595 = vunpack.c.0.s8 %v579
        %v596 = vunpack.c.0.s8 %v580
        %v597 = vunpack.c.0.s8 %v581
        %v598 = vunpack.c.0.s8 %v582
        %v599 = vunpack.c.0.s8 %v583
        %v600 = vunpack.c.0.s8 %v584
        %v601 = vunpack.c.0.s8 %v585
        %v602 = vunpack.c.0.s8 %v586
        %v603 = vunpack.c.0.s8 %v587
        %v604 = vunpack.c.0.s8 %v588
        %v605 = vunpack.c.0.s8 %v589
        %v606 = vunpack.c.0.s8 %v590
        %v607 = vunpack.c.0.s8 %v591
        %v608 = vunpack.c.0.s8 %v592
        %vm609 = vcmp.ne.s32.totalorder %v593, 0
        %vm610 = vcmp.ne.s32.totalorder %v594, 0
        %vm611 = vcmp.ne.s32.totalorder %v595, 0
        %vm612 = vcmp.ne.s32.totalorder %v596, 0
        %vm613 = vcmp.ne.s32.totalorder %v597, 0
        %vm614 = vcmp.ne.s32.totalorder %v598, 0
        %vm615 = vcmp.ne.s32.totalorder %v599, 0
        %vm616 = vcmp.ne.s32.totalorder %v600, 0
        %vm617 = vcmp.ne.s32.totalorder %v601, 0
        %vm618 = vcmp.ne.s32.totalorder %v602, 0
        %vm619 = vcmp.ne.s32.totalorder %v603, 0
        %vm620 = vcmp.ne.s32.totalorder %v604, 0
        %vm621 = vcmp.ne.s32.totalorder %v605, 0
        %vm622 = vcmp.ne.s32.totalorder %v606, 0
        %vm623 = vcmp.ne.s32.totalorder %v607, 0
        %vm624 = vcmp.ne.s32.totalorder %v608, 0
        %v625 = vsel %vm609, %v485, -9e+15
        %v626 = vsel %vm610, %v486, -9e+15
        %v627 = vsel %vm611, %v487, -9e+15
        %v628 = vsel %vm612, %v488, -9e+15
        %v629 = vsel %vm613, %v489, -9e+15
        %v630 = vsel %vm614, %v490, -9e+15
        %v631 = vsel %vm615, %v491, -9e+15
        %v632 = vsel %vm616, %v492, -9e+15
        %v633 = vsel %vm617, %v493, -9e+15
        %v634 = vsel %vm618, %v494, -9e+15
        %v635 = vsel %vm619, %v495, -9e+15
        %v636 = vsel %vm620, %v496, -9e+15
        %v637 = vsel %vm621, %v497, -9e+15
        %v638 = vsel %vm622, %v498, -9e+15
        %v639 = vsel %vm623, %v499, -9e+15
        %v640 = vsel %vm624, %v500, -9e+15
        %641 = vmax.xlane.f32.xlu0 %v625
        %v642 = vpop.xlane.xlu0 %641
        %643 = vmax.xlane.f32.xlu0 %v626
        %v644 = vpop.xlane.xlu0 %643
        %645 = vmax.xlane.f32.xlu0 %v627
        %v646 = vpop.xlane.xlu0 %645
        %647 = vmax.xlane.f32.xlu0 %v628
        %v648 = vpop.xlane.xlu0 %647
        %649 = vmax.xlane.f32.xlu0 %v629
        %v650 = vpop.xlane.xlu0 %649
        %651 = vmax.xlane.f32.xlu0 %v630
        %v652 = vpop.xlane.xlu0 %651
        %653 = vmax.xlane.f32.xlu0 %v631
        %v654 = vpop.xlane.xlu0 %653
        %655 = vmax.xlane.f32.xlu0 %v632
        %v656 = vpop.xlane.xlu0 %655
        %657 = vmax.xlane.f32.xlu0 %v633
        %v658 = vpop.xlane.xlu0 %657
        %659 = vmax.xlane.f32.xlu0 %v634
        %v660 = vpop.xlane.xlu0 %659
        %661 = vmax.xlane.f32.xlu0 %v635
        %v662 = vpop.xlane.xlu0 %661
        %663 = vmax.xlane.f32.xlu0 %v636
        %v664 = vpop.xlane.xlu0 %663
        %665 = vmax.xlane.f32.xlu0 %v637
        %v666 = vpop.xlane.xlu0 %665
        %667 = vmax.xlane.f32.xlu0 %v638
        %v668 = vpop.xlane.xlu0 %667
        %669 = vmax.xlane.f32.xlu0 %v639
        %v670 = vpop.xlane.xlu0 %669
        %671 = vmax.xlane.f32.xlu0 %v640
        %v672 = vpop.xlane.xlu0 %671
        %v673 = vsub.f32 %v625, %v642
        %v674 = vsub.f32 %v626, %v644
        %v675 = vsub.f32 %v627, %v646
        %v676 = vsub.f32 %v628, %v648
        %v677 = vsub.f32 %v629, %v650
        %v678 = vsub.f32 %v630, %v652
        %v679 = vsub.f32 %v631, %v654
        %v680 = vsub.f32 %v632, %v656
        %v681 = vsub.f32 %v633, %v658
        %v682 = vsub.f32 %v634, %v660
        %v683 = vsub.f32 %v635, %v662
        %v684 = vsub.f32 %v636, %v664
        %v685 = vsub.f32 %v637, %v666
        %v686 = vsub.f32 %v638, %v668
        %v687 = vsub.f32 %v639, %v670
        %v688 = vsub.f32 %v640, %v672
        %v689 = vmul.f32 %v673, 1.442695
        %v690 = vpow.pop %v689
        %v691 = vmul.f32 %v674, 1.442695
        %v692 = vpow.pop %v691
        %v693 = vmul.f32 %v675, 1.442695
        %v694 = vpow.pop %v693
        %v695 = vmul.f32 %v676, 1.442695
        %v696 = vpow.pop %v695
        %v697 = vmul.f32 %v677, 1.442695
        %v698 = vpow.pop %v697
        %v699 = vmul.f32 %v678, 1.442695
        %v700 = vpow.pop %v699
        %v701 = vmul.f32 %v679, 1.442695
        %v702 = vpow.pop %v701
        %v703 = vmul.f32 %v680, 1.442695
        %v704 = vpow.pop %v703
        %v705 = vmul.f32 %v681, 1.442695
        %v706 = vpow.pop %v705
        %v707 = vmul.f32 %v682, 1.442695
        %v708 = vpow.pop %v707
        %v709 = vmul.f32 %v683, 1.442695
        %v710 = vpow.pop %v709
        %v711 = vmul.f32 %v684, 1.442695
        %v712 = vpow.pop %v711
        %v713 = vmul.f32 %v685, 1.442695
        %v714 = vpow.pop %v713
        %v715 = vmul.f32 %v686, 1.442695
        %v716 = vpow.pop %v715
        %v717 = vmul.f32 %v687, 1.442695
        %v718 = vpow.pop %v717
        %v719 = vmul.f32 %v688, 1.442695
        %v720 = vpow.pop %v719
        %721 = vadd.xlane.f32.xlu0 %v690
        %v722 = vpop.xlane.xlu0 %721
        %723 = vadd.xlane.f32.xlu0 %v692
        %v724 = vpop.xlane.xlu0 %723
        %725 = vadd.xlane.f32.xlu0 %v694
        %v726 = vpop.xlane.xlu0 %725
        %727 = vadd.xlane.f32.xlu0 %v696
        %v728 = vpop.xlane.xlu0 %727
        %729 = vadd.xlane.f32.xlu0 %v698
        %v730 = vpop.xlane.xlu0 %729
        %731 = vadd.xlane.f32.xlu0 %v700
        %v732 = vpop.xlane.xlu0 %731
        %733 = vadd.xlane.f32.xlu0 %v702
        %v734 = vpop.xlane.xlu0 %733
        %735 = vadd.xlane.f32.xlu0 %v704
        %v736 = vpop.xlane.xlu0 %735
        %737 = vadd.xlane.f32.xlu0 %v706
        %v738 = vpop.xlane.xlu0 %737
        %739 = vadd.xlane.f32.xlu0 %v708
        %v740 = vpop.xlane.xlu0 %739
        %741 = vadd.xlane.f32.xlu0 %v710
        %v742 = vpop.xlane.xlu0 %741
        %743 = vadd.xlane.f32.xlu0 %v712
        %v744 = vpop.xlane.xlu0 %743
        %745 = vadd.xlane.f32.xlu0 %v714
        %v746 = vpop.xlane.xlu0 %745
        %747 = vadd.xlane.f32.xlu0 %v716
        %v748 = vpop.xlane.xlu0 %747
        %749 = vadd.xlane.f32.xlu0 %v718
        %v750 = vpop.xlane.xlu0 %749
        %751 = vadd.xlane.f32.xlu0 %v720
        %v752 = vpop.xlane.xlu0 %751
        %v753 = vrcp.pop %v722
        %v754 = vmul.f32 %v722, %v753
        %v755 = vsub.f32 1.0, %v754
        %v756 = vmul.f32 %v753, %v755
        %v757 = vadd.f32 %v753, %v756
        %vm758 = vweird.f32 %v722
        %vm759 = vweird.f32 %v753
        %vm760 = vmor %vm758, %vm759
        %v761 = vsel %vm760, %v753, %v757
        %v762 = vand.u32 2147483647, %v722
        %vm763 = vcmp.eq.f32.partialorder %v762, 8.507059e+37
        %v764 = vand.u32 %v722, 2147483648
        %v765 = vor.u32 1.1754944e-38, %v764
        %v766 = vsel %vm763, %v765, %v761
        %v767 = vmul.f32 %v690, %v766
        %v768 = vrcp.pop %v724
        %v769 = vmul.f32 %v724, %v768
        %v770 = vsub.f32 1.0, %v769
        %v771 = vmul.f32 %v768, %v770
        %v772 = vadd.f32 %v768, %v771
        %vm773 = vweird.f32 %v724
        %vm774 = vweird.f32 %v768
        %vm775 = vmor %vm773, %vm774
        %v776 = vsel %vm775, %v768, %v772
        %v777 = vand.u32 2147483647, %v724
        %vm778 = vcmp.eq.f32.partialorder %v777, 8.507059e+37
        %v779 = vand.u32 %v724, 2147483648
        %v780 = vor.u32 1.1754944e-38, %v779
        %v781 = vsel %vm778, %v780, %v776
        %v782 = vmul.f32 %v692, %v781
        %v783 = vrcp.pop %v726
        %v784 = vmul.f32 %v726, %v783
        %v785 = vsub.f32 1.0, %v784
        %v786 = vmul.f32 %v783, %v785
        %v787 = vadd.f32 %v783, %v786
        %vm788 = vweird.f32 %v726
        %vm789 = vweird.f32 %v783
        %vm790 = vmor %vm788, %vm789
        %v791 = vsel %vm790, %v783, %v787
        %v792 = vand.u32 2147483647, %v726
        %vm793 = vcmp.eq.f32.partialorder %v792, 8.507059e+37
        %v794 = vand.u32 %v726, 2147483648
        %v795 = vor.u32 1.1754944e-38, %v794
        %v796 = vsel %vm793, %v795, %v791
        %v797 = vmul.f32 %v694, %v796
        %v798 = vrcp.pop %v728
        %v799 = vmul.f32 %v728, %v798
        %v800 = vsub.f32 1.0, %v799
        %v801 = vmul.f32 %v798, %v800
        %v802 = vadd.f32 %v798, %v801
        %vm803 = vweird.f32 %v728
        %vm804 = vweird.f32 %v798
        %vm805 = vmor %vm803, %vm804
        %v806 = vsel %vm805, %v798, %v802
        %v807 = vand.u32 2147483647, %v728
        %vm808 = vcmp.eq.f32.partialorder %v807, 8.507059e+37
        %v809 = vand.u32 %v728, 2147483648
        %v810 = vor.u32 1.1754944e-38, %v809
        %v811 = vsel %vm808, %v810, %v806
        %v812 = vmul.f32 %v696, %v811
        %v813 = vrcp.pop %v730
        %v814 = vmul.f32 %v730, %v813
        %v815 = vsub.f32 1.0, %v814
        %v816 = vmul.f32 %v813, %v815
        %v817 = vadd.f32 %v813, %v816
        %vm818 = vweird.f32 %v730
        %vm819 = vweird.f32 %v813
        %vm820 = vmor %vm818, %vm819
        %v821 = vsel %vm820, %v813, %v817
        %v822 = vand.u32 2147483647, %v730
        %vm823 = vcmp.eq.f32.partialorder %v822, 8.507059e+37
        %v824 = vand.u32 %v730, 2147483648
        %v825 = vor.u32 1.1754944e-38, %v824
        %v826 = vsel %vm823, %v825, %v821
        %v827 = vmul.f32 %v698, %v826
        %v828 = vrcp.pop %v732
        %v829 = vmul.f32 %v732, %v828
        %v830 = vsub.f32 1.0, %v829
        %v831 = vmul.f32 %v828, %v830
        %v832 = vadd.f32 %v828, %v831
        %vm833 = vweird.f32 %v732
        %vm834 = vweird.f32 %v828
        %vm835 = vmor %vm833, %vm834
        %v836 = vsel %vm835, %v828, %v832
        %v837 = vand.u32 2147483647, %v732
        %vm838 = vcmp.eq.f32.partialorder %v837, 8.507059e+37
        %v839 = vand.u32 %v732, 2147483648
        %v840 = vor.u32 1.1754944e-38, %v839
        %v841 = vsel %vm838, %v840, %v836
        %v842 = vmul.f32 %v700, %v841
        %v843 = vrcp.pop %v734
        %v844 = vmul.f32 %v734, %v843
        %v845 = vsub.f32 1.0, %v844
        %v846 = vmul.f32 %v843, %v845
        %v847 = vadd.f32 %v843, %v846
        %vm848 = vweird.f32 %v734
        %vm849 = vweird.f32 %v843
        %vm850 = vmor %vm848, %vm849
        %v851 = vsel %vm850, %v843, %v847
        %v852 = vand.u32 2147483647, %v734
        %vm853 = vcmp.eq.f32.partialorder %v852, 8.507059e+37
        %v854 = vand.u32 %v734, 2147483648
        %v855 = vor.u32 1.1754944e-38, %v854
        %v856 = vsel %vm853, %v855, %v851
        %v857 = vmul.f32 %v702, %v856
        %v858 = vrcp.pop %v736
        %v859 = vmul.f32 %v736, %v858
        %v860 = vsub.f32 1.0, %v859
        %v861 = vmul.f32 %v858, %v860
        %v862 = vadd.f32 %v858, %v861
        %vm863 = vweird.f32 %v736
        %vm864 = vweird.f32 %v858
        %vm865 = vmor %vm863, %vm864
        %v866 = vsel %vm865, %v858, %v862
        %v867 = vand.u32 2147483647, %v736
        %vm868 = vcmp.eq.f32.partialorder %v867, 8.507059e+37
        %v869 = vand.u32 %v736, 2147483648
        %v870 = vor.u32 1.1754944e-38, %v869
        %v871 = vsel %vm868, %v870, %v866
        %v872 = vmul.f32 %v704, %v871
        %v873 = vrcp.pop %v738
        %v874 = vmul.f32 %v738, %v873
        %v875 = vsub.f32 1.0, %v874
        %v876 = vmul.f32 %v873, %v875
        %v877 = vadd.f32 %v873, %v876
        %vm878 = vweird.f32 %v738
        %vm879 = vweird.f32 %v873
        %vm880 = vmor %vm878, %vm879
        %v881 = vsel %vm880, %v873, %v877
        %v882 = vand.u32 2147483647, %v738
        %vm883 = vcmp.eq.f32.partialorder %v882, 8.507059e+37
        %v884 = vand.u32 %v738, 2147483648
        %v885 = vor.u32 1.1754944e-38, %v884
        %v886 = vsel %vm883, %v885, %v881
        %v887 = vmul.f32 %v706, %v886
        %v888 = vrcp.pop %v740
        %v889 = vmul.f32 %v740, %v888
        %v890 = vsub.f32 1.0, %v889
        %v891 = vmul.f32 %v888, %v890
        %v892 = vadd.f32 %v888, %v891
        %vm893 = vweird.f32 %v740
        %vm894 = vweird.f32 %v888
        %vm895 = vmor %vm893, %vm894
        %v896 = vsel %vm895, %v888, %v892
        %v897 = vand.u32 2147483647, %v740
        %vm898 = vcmp.eq.f32.partialorder %v897, 8.507059e+37
        %v899 = vand.u32 %v740, 2147483648
        %v900 = vor.u32 1.1754944e-38, %v899
        %v901 = vsel %vm898, %v900, %v896
        %v902 = vmul.f32 %v708, %v901
        %v903 = vrcp.pop %v742
        %v904 = vmul.f32 %v742, %v903
        %v905 = vsub.f32 1.0, %v904
        %v906 = vmul.f32 %v903, %v905
        %v907 = vadd.f32 %v903, %v906
        %vm908 = vweird.f32 %v742
        %vm909 = vweird.f32 %v903
        %vm910 = vmor %vm908, %vm909
        %v911 = vsel %vm910, %v903, %v907
        %v912 = vand.u32 2147483647, %v742
        %vm913 = vcmp.eq.f32.partialorder %v912, 8.507059e+37
        %v914 = vand.u32 %v742, 2147483648
        %v915 = vor.u32 1.1754944e-38, %v914
        %v916 = vsel %vm913, %v915, %v911
        %v917 = vmul.f32 %v710, %v916
        %v918 = vrcp.pop %v744
        %v919 = vmul.f32 %v744, %v918
        %v920 = vsub.f32 1.0, %v919
        %v921 = vmul.f32 %v918, %v920
        %v922 = vadd.f32 %v918, %v921
        %vm923 = vweird.f32 %v744
        %vm924 = vweird.f32 %v918
        %vm925 = vmor %vm923, %vm924
        %v926 = vsel %vm925, %v918, %v922
        %v927 = vand.u32 2147483647, %v744
        %vm928 = vcmp.eq.f32.partialorder %v927, 8.507059e+37
        %v929 = vand.u32 %v744, 2147483648
        %v930 = vor.u32 1.1754944e-38, %v929
        %v931 = vsel %vm928, %v930, %v926
        %v932 = vmul.f32 %v712, %v931
        %v933 = vrcp.pop %v746
        %v934 = vmul.f32 %v746, %v933
        %v935 = vsub.f32 1.0, %v934
        %v936 = vmul.f32 %v933, %v935
        %v937 = vadd.f32 %v933, %v936
        %vm938 = vweird.f32 %v746
        %vm939 = vweird.f32 %v933
        %vm940 = vmor %vm938, %vm939
        %v941 = vsel %vm940, %v933, %v937
        %v942 = vand.u32 2147483647, %v746
        %vm943 = vcmp.eq.f32.partialorder %v942, 8.507059e+37
        %v944 = vand.u32 %v746, 2147483648
        %v945 = vor.u32 1.1754944e-38, %v944
        %v946 = vsel %vm943, %v945, %v941
        %v947 = vmul.f32 %v714, %v946
        %v948 = vrcp.pop %v748
        %v949 = vmul.f32 %v748, %v948
        %v950 = vsub.f32 1.0, %v949
        %v951 = vmul.f32 %v948, %v950
        %v952 = vadd.f32 %v948, %v951
        %vm953 = vweird.f32 %v748
        %vm954 = vweird.f32 %v948
        %vm955 = vmor %vm953, %vm954
        %v956 = vsel %vm955, %v948, %v952
        %v957 = vand.u32 2147483647, %v748
        %vm958 = vcmp.eq.f32.partialorder %v957, 8.507059e+37
        %v959 = vand.u32 %v748, 2147483648
        %v960 = vor.u32 1.1754944e-38, %v959
        %v961 = vsel %vm958, %v960, %v956
        %v962 = vmul.f32 %v716, %v961
        %v963 = vrcp.pop %v750
        %v964 = vmul.f32 %v750, %v963
        %v965 = vsub.f32 1.0, %v964
        %v966 = vmul.f32 %v963, %v965
        %v967 = vadd.f32 %v963, %v966
        %vm968 = vweird.f32 %v750
        %vm969 = vweird.f32 %v963
        %vm970 = vmor %vm968, %vm969
        %v971 = vsel %vm970, %v963, %v967
        %v972 = vand.u32 2147483647, %v750
        %vm973 = vcmp.eq.f32.partialorder %v972, 8.507059e+37
        %v974 = vand.u32 %v750, 2147483648
        %v975 = vor.u32 1.1754944e-38, %v974
        %v976 = vsel %vm973, %v975, %v971
        %v977 = vmul.f32 %v718, %v976
        %v978 = vrcp.pop %v752
        %v979 = vmul.f32 %v752, %v978
        %v980 = vsub.f32 1.0, %v979
        %v981 = vmul.f32 %v978, %v980
        %v982 = vadd.f32 %v978, %v981
        %vm983 = vweird.f32 %v752
        %vm984 = vweird.f32 %v978
        %vm985 = vmor %vm983, %vm984
        %v986 = vsel %vm985, %v978, %v982
        %v987 = vand.u32 2147483647, %v752
        %vm988 = vcmp.eq.f32.partialorder %v987, 8.507059e+37
        %v989 = vand.u32 %v752, 2147483648
        %v990 = vor.u32 1.1754944e-38, %v989
        %v991 = vsel %vm988, %v990, %v986
        %v992 = vmul.f32 %v720, %v991
        %v993 = vld [vmem:[%s319] sm:$0xff]
        %v994 = vld [vmem:[%s319 + $0x8] sm:$0xff]
        %v995 = vld [vmem:[%s319 + $0x10] sm:$0xff]
        %v996 = vld [vmem:[%s319 + $0x18] sm:$0xff]
        %v997 = vld [vmem:[%s319 + $0x20] sm:$0xff]
        %v998 = vld [vmem:[%s319 + $0x28] sm:$0xff]
        %v999 = vld [vmem:[%s319 + $0x30] sm:$0xff]
        %v1000 = vld [vmem:[%s319 + $0x38] sm:$0xff]
        %v1001 = vld [vmem:[%s319 + $0x40] sm:$0xff]
        %v1002 = vld [vmem:[%s319 + $0x48] sm:$0xff]
        %v1003 = vld [vmem:[%s319 + $0x50] sm:$0xff]
        %v1004 = vld [vmem:[%s319 + $0x58] sm:$0xff]
        %v1005 = vld [vmem:[%s319 + $0x60] sm:$0xff]
        %v1006 = vld [vmem:[%s319 + $0x68] sm:$0xff]
        %v1007 = vld [vmem:[%s319 + $0x70] sm:$0xff]
        %v1008 = vld [vmem:[%s319 + $0x78] sm:$0xff]
        %v1009 = vld [vmem:[%s4] sm:$0x1]
        %v1011 = vperm.slane %v1009, 0
        %1013 = vmatpush.msra.mxu0 %v1008
        %1014 = vmatpush.msra.mxu0 %v1007
        %1015 = vmatpush.msra.mxu0 %v1006
        %1016 = vmatpush.msra.mxu0 %v1005
        %1017 = vmatpush.msra.mxu0 %v1004
        %1018 = vmatpush.msra.mxu0 %v1003
        %1019 = vmatpush.msra.mxu0 %v1002
        %1020 = vmatpush.msra.mxu0 %v1001
        %1021 = vmatpush.msra.mxu0 %v1000
        %1022 = vmatpush.msra.mxu0 %v999
        %1023 = vmatpush.msra.mxu0 %v998
        %1024 = vmatpush.msra.mxu0 %v997
        %1025 = vmatpush.msra.mxu0 %v996
        %1026 = vmatpush.msra.mxu0 %v995
        %1027 = vmatpush.msra.mxu0 %v994
        %1028 = vmatpush.msra.mxu0 %v993
        %1029 = vmatmul.f32.gmra.mxu0 %v767
        %v1030 = vpop.f32.mrf.mxu0
        %v1031 = vadd.f32 %v1011, %v1030
        %1032 = vmatmul.f32.gmra.mxu0 %v782
        %v1033 = vpop.f32.mrf.mxu0
        %v1034 = vadd.f32 %v1011, %v1033
        %1035 = vmatmul.f32.gmra.mxu0 %v797
        %v1036 = vpop.f32.mrf.mxu0
        %v1037 = vadd.f32 %v1011, %v1036
        %1038 = vmatmul.f32.gmra.mxu0 %v812
        %v1039 = vpop.f32.mrf.mxu0
        %v1040 = vadd.f32 %v1011, %v1039
        %1041 = vmatmul.f32.gmra.mxu0 %v827
        %v1042 = vpop.f32.mrf.mxu0
        %v1043 = vadd.f32 %v1011, %v1042
        %1044 = vmatmul.f32.gmra.mxu0 %v842
        %v1045 = vpop.f32.mrf.mxu0
        %v1046 = vadd.f32 %v1011, %v1045
        %1047 = vmatmul.f32.gmra.mxu0 %v857
        %v1048 = vpop.f32.mrf.mxu0
        %v1049 = vadd.f32 %v1011, %v1048
        %1050 = vmatmul.f32.gmra.mxu0 %v872
        %v1051 = vpop.f32.mrf.mxu0
        %v1052 = vadd.f32 %v1011, %v1051
        %1053 = vmatmul.f32.gmra.mxu0 %v887
        %v1054 = vpop.f32.mrf.mxu0
        %v1055 = vadd.f32 %v1011, %v1054
        %1056 = vmatmul.f32.gmra.mxu0 %v902
        %v1057 = vpop.f32.mrf.mxu0
        %v1058 = vadd.f32 %v1011, %v1057
        %1059 = vmatmul.f32.gmra.mxu0 %v917
        %v1060 = vpop.f32.mrf.mxu0
        %v1061 = vadd.f32 %v1011, %v1060
        %1062 = vmatmul.f32.gmra.mxu0 %v932
        %v1063 = vpop.f32.mrf.mxu0
        %v1064 = vadd.f32 %v1011, %v1063
        %1065 = vmatmul.f32.gmra.mxu0 %v947
        %v1066 = vpop.f32.mrf.mxu0
        %v1067 = vadd.f32 %v1011, %v1066
        %1068 = vmatmul.f32.gmra.mxu0 %v962
        %v1069 = vpop.f32.mrf.mxu0
        %v1070 = vadd.f32 %v1011, %v1069
        %1071 = vmatmul.f32.gmra.mxu0 %v977
        %v1072 = vpop.f32.mrf.mxu0
        %v1073 = vadd.f32 %v1011, %v1072
        %1074 = vmatmul.f32.gmra.mxu0 %v992
        %v1075 = vpop.f32.mrf.mxu0
        %v1076 = vadd.f32 %v1011, %v1075
        %1077 = vdwg.mxu0
        %v1078 = vmin.f32 %v1031, 0.0
        %v1079 = vmin.f32 %v1034, 0.0
        %v1080 = vmin.f32 %v1037, 0.0
        %v1081 = vmin.f32 %v1040, 0.0
        %v1082 = vmin.f32 %v1043, 0.0
        %v1083 = vmin.f32 %v1046, 0.0
        %v1084 = vmin.f32 %v1049, 0.0
        %v1085 = vmin.f32 %v1052, 0.0
        %v1086 = vmin.f32 %v1055, 0.0
        %v1087 = vmin.f32 %v1058, 0.0
        %v1088 = vmin.f32 %v1061, 0.0
        %v1089 = vmin.f32 %v1064, 0.0
        %v1090 = vmin.f32 %v1067, 0.0
        %v1091 = vmin.f32 %v1070, 0.0
        %v1092 = vmin.f32 %v1073, 0.0
        %v1093 = vmin.f32 %v1076, 0.0
        %v1094 = vmul.f32 %v1078, 1.442695
        %v1095 = vpow.pop %v1094
        %v1096 = vmul.f32 %v1079, 1.442695
        %v1097 = vpow.pop %v1096
        %v1098 = vmul.f32 %v1080, 1.442695
        %v1099 = vpow.pop %v1098
        %v1100 = vmul.f32 %v1081, 1.442695
        %v1101 = vpow.pop %v1100
        %v1102 = vmul.f32 %v1082, 1.442695
        %v1103 = vpow.pop %v1102
        %v1104 = vmul.f32 %v1083, 1.442695
        %v1105 = vpow.pop %v1104
        %v1106 = vmul.f32 %v1084, 1.442695
        %v1107 = vpow.pop %v1106
        %v1108 = vmul.f32 %v1085, 1.442695
        %v1109 = vpow.pop %v1108
        %v1110 = vmul.f32 %v1086, 1.442695
        %v1111 = vpow.pop %v1110
        %v1112 = vmul.f32 %v1087, 1.442695
        %v1113 = vpow.pop %v1112
        %v1114 = vmul.f32 %v1088, 1.442695
        %v1115 = vpow.pop %v1114
        %v1116 = vmul.f32 %v1089, 1.442695
        %v1117 = vpow.pop %v1116
        %v1118 = vmul.f32 %v1090, 1.442695
        %v1119 = vpow.pop %v1118
        %v1120 = vmul.f32 %v1091, 1.442695
        %v1121 = vpow.pop %v1120
        %v1122 = vmul.f32 %v1092, 1.442695
        %v1123 = vpow.pop %v1122
        %v1124 = vmul.f32 %v1093, 1.442695
        %v1125 = vpow.pop %v1124
        %v1126 = vsub.f32 %v1095, 1.0
        %v1127 = vsub.f32 %v1097, 1.0
        %v1128 = vsub.f32 %v1099, 1.0
        %v1129 = vsub.f32 %v1101, 1.0
        %v1130 = vsub.f32 %v1103, 1.0
        %v1131 = vsub.f32 %v1105, 1.0
        %v1132 = vsub.f32 %v1107, 1.0
        %v1133 = vsub.f32 %v1109, 1.0
        %v1134 = vsub.f32 %v1111, 1.0
        %v1135 = vsub.f32 %v1113, 1.0
        %v1136 = vsub.f32 %v1115, 1.0
        %v1137 = vsub.f32 %v1117, 1.0
        %v1138 = vsub.f32 %v1119, 1.0
        %v1139 = vsub.f32 %v1121, 1.0
        %v1140 = vsub.f32 %v1123, 1.0
        %v1141 = vsub.f32 %v1125, 1.0
        %vm1142 = vcmp.gt.f32.partialorder %v1031, 0.0
        %vm1143 = vcmp.gt.f32.partialorder %v1034, 0.0
        %vm1144 = vcmp.gt.f32.partialorder %v1037, 0.0
        %vm1145 = vcmp.gt.f32.partialorder %v1040, 0.0
        %vm1146 = vcmp.gt.f32.partialorder %v1043, 0.0
        %vm1147 = vcmp.gt.f32.partialorder %v1046, 0.0
        %vm1148 = vcmp.gt.f32.partialorder %v1049, 0.0
        %vm1149 = vcmp.gt.f32.partialorder %v1052, 0.0
        %vm1150 = vcmp.gt.f32.partialorder %v1055, 0.0
        %vm1151 = vcmp.gt.f32.partialorder %v1058, 0.0
        %vm1152 = vcmp.gt.f32.partialorder %v1061, 0.0
        %vm1153 = vcmp.gt.f32.partialorder %v1064, 0.0
        %vm1154 = vcmp.gt.f32.partialorder %v1067, 0.0
        %vm1155 = vcmp.gt.f32.partialorder %v1070, 0.0
        %vm1156 = vcmp.gt.f32.partialorder %v1073, 0.0
        %vm1157 = vcmp.gt.f32.partialorder %v1076, 0.0
        %v1158 = vsel %vm1142, %v1031, %v1126
        %v1159 = vsel %vm1143, %v1034, %v1127
        %v1160 = vsel %vm1144, %v1037, %v1128
        %v1161 = vsel %vm1145, %v1040, %v1129
        %v1162 = vsel %vm1146, %v1043, %v1130
        %v1163 = vsel %vm1147, %v1046, %v1131
        %v1164 = vsel %vm1148, %v1049, %v1132
        %v1165 = vsel %vm1149, %v1052, %v1133
        %v1166 = vsel %vm1150, %v1055, %v1134
        %v1167 = vsel %vm1151, %v1058, %v1135
        %v1168 = vsel %vm1152, %v1061, %v1136
        %v1169 = vsel %vm1153, %v1064, %v1137
        %v1170 = vsel %vm1154, %v1067, %v1138
        %v1171 = vsel %vm1155, %v1070, %v1139
        %v1172 = vsel %vm1156, %v1073, %v1140
        %v1173 = vsel %vm1157, %v1076, %v1141
        %1174 = vst [vmem:[%s314] sm:$0xff] %v1158
        %1175 = vst [vmem:[%s314 + $0x8] sm:$0xff] %v1159
        %1176 = vst [vmem:[%s314 + $0x10] sm:$0xff] %v1160
        %1177 = vst [vmem:[%s314 + $0x18] sm:$0xff] %v1161
        %1178 = vst [vmem:[%s314 + $0x20] sm:$0xff] %v1162
        %1179 = vst [vmem:[%s314 + $0x28] sm:$0xff] %v1163
        %1180 = vst [vmem:[%s314 + $0x30] sm:$0xff] %v1164
        %1181 = vst [vmem:[%s314 + $0x38] sm:$0xff] %v1165
        %1182 = vst [vmem:[%s314 + $0x40] sm:$0xff] %v1166
        %1183 = vst [vmem:[%s314 + $0x48] sm:$0xff] %v1167
        %1184 = vst [vmem:[%s314 + $0x50] sm:$0xff] %v1168
        %1185 = vst [vmem:[%s314 + $0x58] sm:$0xff] %v1169
        %1186 = vst [vmem:[%s314 + $0x60] sm:$0xff] %v1170
        %1187 = vst [vmem:[%s314 + $0x68] sm:$0xff] %v1171
        %1188 = vst [vmem:[%s314 + $0x70] sm:$0xff] %v1172
        %1189 = vst [vmem:[%s314 + $0x78] sm:$0xff] %v1173
        %s1190 = sand.u32 %s173, 1
        %s1191 = scalar_lea.sflag [#allocation4], %s1190
        %s1192 = sand.u32 %s173, 1
        %s1193 = smul.addr %s1192, 128
        %s1194 = scalar_lea.vmem [#allocation5], %s1193
        // Predicated region
        $region45: #{tpu_custom_call.1} parent=39 // pred_check
          %p1195 = pneg %p183
        $region46: #{tpu_custom_call.1} parent=39 // pred_check_branch
          %1197 = sbr.rel (%p1195) target = $region48
        $region47: #{tpu_custom_call.1} parent=39 // pred_region
          %s1198 = smul.u32 16, %s27
          %1200 = vsyncadd %s1191, 0
          %s1201 = smul.addr %s26, 16
          %s1202 = sadd.s32 %s1198, %s1201
          %s1203 = smul.addr %s1202, 8
          %s1204 = scalar_lea.hbm %s5, %s1203
          %s1205 = sshll.u32 %s1194, 4
          %s1206 = int_to_ptr.vmem [resolvable:$true] %s1205
          %s1207 = sshll.u32 %s1204, 4
          %s1208 = int_to_ptr.hbm [resolvable:$true] %s1207
          %1213 = dma.vmem_to_hbm [thread:$0]  %s1206, 2048, %s1208, %s1191, 128, 128, 8
        $region48: #{tpu_custom_call.1} parent=39 // pred_fallthru
          _
      $region40: #{tpu_custom_call.1} parent=5 // pred_fallthru
        _
      %p1214 = scmp.le.s32.totalorder 2, %s17
      // Predicated region
      $region49: #{tpu_custom_call.1} parent=5 // pred_check
        %p1215 = pneg %p1214
      $region50: #{tpu_custom_call.1} parent=5 // pred_check_branch
        %1217 = sbr.rel (%p1215) target = $region52
      $region51: #{tpu_custom_call.1} parent=5 // pred_region
        %s1218 = ssub.s32 %s17, 2
        // Predicated region
        $region53: #{tpu_custom_call.1} parent=51 // pred_check
          %p1219 = pneg %p189
        $region54: #{tpu_custom_call.1} parent=51 // pred_check_branch
          %1221 = sbr.rel (%p1219) target = $region56
        $region55: #{tpu_custom_call.1} parent=51 // pred_region
          %s1222 = sand.u32 %s174, 1
          %s1223 = scalar_lea.sflag [#allocation4], %s1222
          %s1224 = sand.u32 %s174, 1
          %s1225 = smul.addr %s1224, 128
          %s1226 = scalar_lea.vmem [#allocation5], %s1225
          %1228 = dma.done %s1223, 2048
        $region56: #{tpu_custom_call.1} parent=51 // pred_fallthru
          _
      $region52: #{tpu_custom_call.1} parent=5 // pred_fallthru
        _
    $region6: #{tpu_custom_call.1} parent=1 // loop_footer
      %s21 = sadd.s32 1, %s17
    $region7: #{tpu_custom_call.1} parent=1 // loop_footer_branch
      %16 = sbr.rel target = $region3
    $region8: #{tpu_custom_call.1} parent=1 // loop_exit
      _
    %1229 = vsyncpa [#allocation3], 1
    %s1230 = scalar_lea.sflag [#allocation3], 1
    %1231 = vsyncpa %s1230, 1
    %1232 = vsyncpa [#allocation4], 1
    %s1233 = scalar_lea.sflag [#allocation4], 1
    %1234 = vsyncpa %s1233, 1

</llo_original>
